<compile_context>
chip_gen: v6e
topology: v6e:2x2x1
jax: 0.10.0
libtpu: 0.0.40
codegen_flags: <defaults>
</compile_context>

<pallas_src>
import math
import jax
import jax.numpy as jnp
from jax.experimental import pallas as pl
from jax.experimental.pallas import tpu as pltpu

_GELU_C = 0.7978845608028654  # sqrt(2/pi)


def _gelu_tanh(h):
    # Matches torch.nn.GELU(approximate='tanh'), computed in f32.
    return 0.5 * h * (1.0 + jnp.tanh(_GELU_C * (h + 0.044715 * h * h * h)))


# --------------------------------------------------------------------------- #
# Kernels
# --------------------------------------------------------------------------- #
def mlp_resident_kernel(x_ref, w1_ref, b1_ref, w2_ref, b2_ref, o_ref):
    # x_ref:  (tm, n_embd)        row tile of tokens
    # w1_ref: (n_embd, hidden)    full c_fc weight (resident in VMEM)
    # b1_ref: (1, hidden)
    # w2_ref: (hidden, n_embd)    full c_proj weight (resident in VMEM)
    # b2_ref: (1, n_embd)
    # o_ref:  (tm, n_embd)
    x = x_ref[...]
    h = jnp.dot(x, w1_ref[...], preferred_element_type=jnp.float32)
    h = h + b1_ref[...].astype(jnp.float32)
    g = _gelu_tanh(h)
    y = jnp.dot(g.astype(w2_ref.dtype), w2_ref[...],
                preferred_element_type=jnp.float32)
    y = y + b2_ref[...].astype(jnp.float32)
    o_ref[...] = y.astype(o_ref.dtype)


def mlp_streamed_kernel(x_ref, w1_ref, b1_ref, w2_ref, b2_ref, o_ref, acc_ref):
    # x_ref:  (tm, n_embd)   row tile (same tile for every k step)
    # w1_ref: (n_embd, tk)   c_fc weight K-tile
    # b1_ref: (1, tk)        c_fc bias K-tile
    # w2_ref: (tk, n_embd)   c_proj weight K-tile
    # b2_ref: (1, n_embd)    c_proj bias (constant)
    # o_ref:  (tm, n_embd)   output row tile (written on last k step)
    # acc_ref:(tm, n_embd)   f32 VMEM accumulator
    k = pl.program_id(1)

    @pl.when(k == 0)
    def _():
        # Seed the accumulator with the c_proj bias (saves a finalize read+add).
        acc_ref[...] = jnp.broadcast_to(
            b2_ref[...].astype(jnp.float32), acc_ref.shape)

    x = x_ref[...]
    h = jnp.dot(x, w1_ref[...], preferred_element_type=jnp.float32)
    h = h + b1_ref[...].astype(jnp.float32)
    g = _gelu_tanh(h)
    acc_ref[...] += jnp.dot(g.astype(w2_ref.dtype), w2_ref[...],
                            preferred_element_type=jnp.float32)

    @pl.when(k == pl.num_programs(1) - 1)
    def _():
        o_ref[...] = acc_ref[...].astype(o_ref.dtype)


# --------------------------------------------------------------------------- #
# Planning helpers
# --------------------------------------------------------------------------- #
def _round_up(a, b):
    return (a + b - 1) // b * b


def _vmem_budget_bytes():
    """Usable VMEM budget with headroom for Mosaic internal scratch."""
    try:
        cap = int(pltpu.get_tpu_info().vmem_capacity_bytes)
    except Exception:
        cap = 64 << 20  # conservative default (fits every generation)
    return int(cap * 0.85)


def _streamed_vmem_bytes(tm, tk, n_embd, itemsize):
    xb = 2 * tm * n_embd * itemsize            # x tile, double-buffered
    ob = 2 * tm * n_embd * itemsize            # output tile, double-buffered
    w1b = 2 * n_embd * tk * itemsize           # W1 K-tile
    w2b = 2 * tk * n_embd * itemsize           # W2 K-tile
    bb = 2 * (tk + n_embd) * itemsize          # biases
    acc = tm * n_embd * 4                      # f32 accumulator scratch
    tmp = tm * tk * 4 + tm * tk * itemsize     # h (f32) + g cast temporaries
    return xb + ob + w1b + w2b + bb + acc + tmp


def _resident_vmem_bytes(tm, n_embd, hidden, itemsize):
    xb = 2 * tm * n_embd * itemsize
    ob = 2 * tm * n_embd * itemsize
    wb = 2 * (2 * n_embd * hidden) * itemsize  # W1 + W2 (counted with 2 buffers)
    bb = 2 * (hidden + n_embd) * itemsize
    tmp = tm * hidden * 4 + tm * hidden * itemsize  # h (f32) + g cast temporaries
    return xb + ob + wb + bb + tmp


_TM_CANDIDATES = (1024, 768, 512, 384, 256, 128, 64, 32, 16)


def _pick_tm(resident, n_embd, hidden_pad, tk, itemsize, budget):
    for tm in _TM_CANDIDATES:
        if resident:
            need = _resident_vmem_bytes(tm, n_embd, hidden_pad, itemsize)
        else:
            need = _streamed_vmem_bytes(tm, tk, n_embd, itemsize)
        if need <= budget:
            return tm
    return 16


def prepare_mlp_params(w1, b1, w2, b2, *, compute_dtype=jnp.bfloat16,
                       tk=512, resident=None):
    """One-time weight preparation: cast to the MXU compute dtype and (for the
    streamed variant) zero-pad the hidden axis to a multiple of tk.  Call once
    and reuse across forward calls so the f32->bf16 casts are not re-run per step."""
    n_embd, hidden = w1.shape
    itemsize = jnp.dtype(compute_dtype).itemsize
    budget = _vmem_budget_bytes()
    if resident is None:
        # Resident whenever the full weights + a modest row tile fit the budget.
        resident = _resident_vmem_bytes(256, n_embd, hidden, itemsize) <= budget

    if resident:
        hidden_pad = hidden
        tk_eff = hidden
    else:
        tk_eff = min(tk, _round_up(hidden, 128))
        hidden_pad = _round_up(hidden, tk_eff)

    pad_h = hidden_pad - hidden
    w1c = w1.astype(compute_dtype)
    w2c = w2.astype(compute_dtype)
    b1c = b1.reshape(1, hidden).astype(compute_dtype)
    b2c = b2.reshape(1, n_embd).astype(compute_dtype)
    if pad_h:
        # Zero-padded W1 columns / b1 entries / W2 rows contribute exactly zero.
        w1c = jnp.pad(w1c, ((0, 0), (0, pad_h)))
        b1c = jnp.pad(b1c, ((0, 0), (0, pad_h)))
        w2c = jnp.pad(w2c, ((0, pad_h), (0, 0)))

    return dict(w1=w1c, b1=b1c, w2=w2c, b2=b2c,
                n_embd=n_embd, hidden_pad=hidden_pad, tk=tk_eff,
                resident=resident, compute_dtype=compute_dtype)


# --------------------------------------------------------------------------- #
# Forward
# --------------------------------------------------------------------------- #
def mlp_forward(x, params, *, tm=None):
    """x: [B, T, n_embd] -> [B, T, n_embd] (MLP sub-module of a GPT-2 Block)."""
    B, T, n_embd = x.shape
    assert n_embd == params["n_embd"]
    compute_dtype = params["compute_dtype"]
    itemsize = jnp.dtype(compute_dtype).itemsize
    resident = params["resident"]
    hidden_pad = params["hidden_pad"]
    tk = params["tk"]

    budget = _vmem_budget_bytes()
    if tm is None:
        tm = _pick_tm(resident, n_embd, hidden_pad, tk, itemsize, budget)

    M = B * T
    # Clamp the row tile for small problems; keep it a multiple of 16 so bf16
    # sublane packing stays unmasked.
    tm_eff = max(16, min(tm, _round_up(M, 16)))
    M_pad = _round_up(M, tm_eff)

    x2d = x.reshape(M, n_embd).astype(compute_dtype)
    if M_pad != M:
        x2d = jnp.pad(x2d, ((0, M_pad - M), (0, 0)))

    w1, b1, w2, b2 = params["w1"], params["b1"], params["w2"], params["b2"]

    compiler_params = pltpu.CompilerParams(
        dimension_semantics=("parallel",) if resident else ("parallel", "arbitrary"),
        vmem_limit_bytes=int(budget),
    )

    if resident:
        out2d = pl.pallas_call(
            mlp_resident_kernel,
            out_shape=jax.ShapeDtypeStruct((M_pad, n_embd), compute_dtype),
            grid_spec=pltpu.PrefetchScalarGridSpec(
                num_scalar_prefetch=0,
                grid=(M_pad // tm_eff,),
                in_specs=[
                    pl.BlockSpec((tm_eff, n_embd), lambda i: (i, 0)),       # x rows
                    pl.BlockSpec((n_embd, hidden_pad), lambda i: (0, 0)),   # W1 (resident)
                    pl.BlockSpec((1, hidden_pad), lambda i: (0, 0)),        # b1
                    pl.BlockSpec((hidden_pad, n_embd), lambda i: (0, 0)),   # W2 (resident)
                    pl.BlockSpec((1, n_embd), lambda i: (0, 0)),            # b2
                ],
                out_specs=pl.BlockSpec((tm_eff, n_embd), lambda i: (i, 0)),
            ),
            compiler_params=compiler_params,
        )(x2d, w1, b1, w2, b2)
    else:
        out2d = pl.pallas_call(
            mlp_streamed_kernel,
            out_shape=jax.ShapeDtypeStruct((M_pad, n_embd), compute_dtype),
            grid_spec=pltpu.PrefetchScalarGridSpec(
                num_scalar_prefetch=0,
                grid=(M_pad // tm_eff, hidden_pad // tk),
                in_specs=[
                    pl.BlockSpec((tm_eff, n_embd), lambda i, k: (i, 0)),    # x rows
                    pl.BlockSpec((n_embd, tk), lambda i, k: (0, k)),        # W1 K-tile
                    pl.BlockSpec((1, tk), lambda i, k: (0, k)),             # b1 K-tile
                    pl.BlockSpec((tk, n_embd), lambda i, k: (k, 0)),        # W2 K-tile
                    pl.BlockSpec((1, n_embd), lambda i, k: (0, 0)),         # b2
                ],
                out_specs=pl.BlockSpec((tm_eff, n_embd), lambda i, k: (i, 0)),
                scratch_shapes=[pltpu.VMEM((tm_eff, n_embd), jnp.float32)],
            ),
            compiler_params=compiler_params,
        )(x2d, w1, b1, w2, b2)

    return out2d[:M].reshape(B, T, n_embd)


# TODO(synk): the rest of the GPT forward (causal attention, LayerNorm, embeddings,
# lm_head, cross-entropy) is not fused here; this kernel covers the MLP sub-module
# of each Block.

if __name__ == "__main__":
    # Small GPT-2-style config: n_embd=128 (lane-dense), hidden=4*n_embd=512.
    # B*T = 20 is NOT a multiple of 16 -> exercises the row-padding path.
    B, T, n_embd = 2, 10, 128
    hidden = 4 * n_embd

    key = jax.random.PRNGKey(0)
    kx, k1, k2, k3, k4 = jax.random.split(key, 5)

    x = jax.random.normal(kx, (B, T, n_embd), dtype=jnp.float32)

    # Deterministic parameter init (nn.Linear-like uniform bounds).
    bound1 = 1.0 / math.sqrt(n_embd)
    w1 = jax.random.uniform(k1, (n_embd, hidden), jnp.float32, -bound1, bound1)
    b1 = jax.random.uniform(k2, (hidden,), jnp.float32, -bound1, bound1)
    bound2 = 1.0 / math.sqrt(hidden)
    w2 = jax.random.uniform(k3, (hidden, n_embd), jnp.float32, -bound2, bound2)
    b2 = jax.random.uniform(k4, (n_embd,), jnp.float32, -bound2, bound2)

    # Plain-JAX reference (same tanh-GELU formula), f32.
    h_ref = x @ w1 + b1
    g_ref = 0.5 * h_ref * (1.0 + jnp.tanh(_GELU_C * (h_ref + 0.044715 * h_ref ** 3)))
    y_ref = g_ref @ w2 + b2

    # 1) Resident-weight variant, f32 compute: tight check.
    p_f32 = prepare_mlp_params(w1, b1, w2, b2, compute_dtype=jnp.float32)
    assert p_f32["resident"], "expected resident variant for this tiny config"
    out_res = mlp_forward(x, p_f32)
    jax.block_until_ready(out_res)
    assert jnp.allclose(out_res, y_ref, atol=1e-4, rtol=1e-4), \
        "f32 resident mismatch vs reference"

    # 2) Streamed-K variant with tk=384 (does NOT divide hidden=512): exercises the
    #    zero-padded hidden axis and the b2-seeded accumulator init/finalize path.
    p_stream = prepare_mlp_params(w1, b1, w2, b2, compute_dtype=jnp.float32,
                                  tk=384, resident=False)
    out_str = mlp_forward(x, p_stream)
    jax.block_until_ready(out_str)
    assert jnp.allclose(out_str, y_ref, atol=1e-4, rtol=1e-4), \
        "f32 streamed (padded hidden) mismatch vs reference"

    # 3) bf16 compute path (production dtype on the MXU), resident: looser check.
    p_bf16 = prepare_mlp_params(w1, b1, w2, b2, compute_dtype=jnp.bfloat16)
    out_bf16 = mlp_forward(x, p_bf16)
    jax.block_until_ready(out_bf16)
    assert jnp.allclose(out_bf16.astype(jnp.float32), y_ref,
                        atol=5e-2, rtol=5e-2), "bf16 mismatch vs reference"

    print("KERNEL_OK")
</pallas_src>

<mosaic_0001>
module attributes {stable_mosaic.version = 11 : i64} {
  func.func @mlp_resident_kernel(%arg0: i32, %arg1: memref<32x128xf32, #tpu.memory_space<vmem>>, %arg2: memref<128x512xf32, #tpu.memory_space<vmem>>, %arg3: memref<1x512xf32, #tpu.memory_space<vmem>>, %arg4: memref<512x128xf32, #tpu.memory_space<vmem>>, %arg5: memref<1x128xf32, #tpu.memory_space<vmem>>, %arg6: memref<32x128xf32, #tpu.memory_space<vmem>>) attributes {dimension_semantics = [#tpu.dimension_semantics<parallel>], iteration_bounds = array<i64: 1>, scalar_prefetch = 0 : i64, scratch_operands = 0 : i64, tpu.core_type = #tpu.core_type<tc>, window_params = [{transform_indices = @transform_0, window_bounds = array<i64: 32, 128>}, {pipeline_mode = #tpu.pipeline_mode<synchronous>, transform_indices = @transform_1, window_bounds = array<i64: 128, 512>}, {pipeline_mode = #tpu.pipeline_mode<synchronous>, transform_indices = @transform_2, window_bounds = array<i64: 1, 512>}, {pipeline_mode = #tpu.pipeline_mode<synchronous>, transform_indices = @transform_3, window_bounds = array<i64: 512, 128>}, {pipeline_mode = #tpu.pipeline_mode<synchronous>, transform_indices = @transform_4, window_bounds = array<i64: 1, 128>}, {transform_indices = @transform_5, window_bounds = array<i64: 32, 128>}]} {
    %c0 = arith.constant 0 : index
    %c0_0 = arith.constant 0 : index
    %0 = vector.load %arg1[%c0, %c0_0] : memref<32x128xf32, #tpu.memory_space<vmem>>, vector<32x128xf32>
    %c0_1 = arith.constant 0 : index
    %c0_2 = arith.constant 0 : index
    %1 = vector.load %arg2[%c0_1, %c0_2] : memref<128x512xf32, #tpu.memory_space<vmem>>, vector<128x512xf32>
    %cst = arith.constant dense<0.000000e+00> : vector<32x512xf32>
    %2 = tpu.matmul %0, %1, %cst {dimension_numbers = #tpu.dot_dimension_numbers<[1], [0], [0], [1], [0, 0, 1, 1], [], []>} : vector<32x128xf32>, vector<128x512xf32>, vector<32x512xf32> -> vector<32x512xf32>
    %c0_3 = arith.constant 0 : index
    %c0_4 = arith.constant 0 : index
    %3 = vector.load %arg3[%c0_3, %c0_4] : memref<1x512xf32, #tpu.memory_space<vmem>>, vector<1x512xf32>
    %4 = vector.broadcast %3 : vector<1x512xf32> to vector<32x512xf32>
    %5 = arith.addf %2, %4 : vector<32x512xf32>
    %cst_5 = arith.constant 5.000000e-01 : f32
    %6 = vector.broadcast %cst_5 : f32 to vector<32x512xf32>
    %7 = arith.mulf %6, %5 : vector<32x512xf32>
    %cst_6 = arith.constant 4.471500e-02 : f32
    %8 = vector.broadcast %cst_6 : f32 to vector<32x512xf32>
    %9 = arith.mulf %8, %5 : vector<32x512xf32>
    %10 = arith.mulf %9, %5 : vector<32x512xf32>
    %11 = arith.mulf %10, %5 : vector<32x512xf32>
    %12 = arith.addf %5, %11 : vector<32x512xf32>
    %cst_7 = arith.constant 0.797884583 : f32
    %13 = vector.broadcast %cst_7 : f32 to vector<32x512xf32>
    %14 = arith.mulf %13, %12 : vector<32x512xf32>
    %15 = math.tanh %14 : vector<32x512xf32>
    %cst_8 = arith.constant 1.000000e+00 : f32
    %16 = vector.broadcast %cst_8 : f32 to vector<32x512xf32>
    %17 = arith.addf %16, %15 : vector<32x512xf32>
    %18 = arith.mulf %7, %17 : vector<32x512xf32>
    %c0_9 = arith.constant 0 : index
    %c0_10 = arith.constant 0 : index
    %19 = vector.load %arg4[%c0_9, %c0_10] : memref<512x128xf32, #tpu.memory_space<vmem>>, vector<512x128xf32>
    %cst_11 = arith.constant dense<0.000000e+00> : vector<32x128xf32>
    %20 = tpu.matmul %18, %19, %cst_11 {dimension_numbers = #tpu.dot_dimension_numbers<[1], [0], [0], [1], [0, 0, 1, 1], [], []>} : vector<32x512xf32>, vector<512x128xf32>, vector<32x128xf32> -> vector<32x128xf32>
    %c0_12 = arith.constant 0 : index
    %c0_13 = arith.constant 0 : index
    %21 = vector.load %arg5[%c0_12, %c0_13] : memref<1x128xf32, #tpu.memory_space<vmem>>, vector<1x128xf32>
    %22 = vector.broadcast %21 : vector<1x128xf32> to vector<32x128xf32>
    %23 = arith.addf %20, %22 : vector<32x128xf32>
    %c0_14 = arith.constant 0 : index
    %c0_15 = arith.constant 0 : index
    %24 = vector.load %arg6[%c0_14, %c0_15] : memref<32x128xf32, #tpu.memory_space<vmem>>, vector<32x128xf32>
    tpu.vector_store %arg6[%c0_14, %c0_15], %23 {strides = array<i32>} : memref<32x128xf32, #tpu.memory_space<vmem>>, vector<32x128xf32>,
    return
  }
  func.func @transform_0(%arg0: i32) -> (i32, i32) {
    %c0_i32 = arith.constant 0 : i32
    %c0_i32_0 = arith.constant 0 : i32
    return %arg0, %c0_i32 : i32, i32
  }
  func.func @transform_1(%arg0: i32) -> (i32, i32) {
    %c0_i32 = arith.constant 0 : i32
    %c0_i32_0 = arith.constant 0 : i32
    %c0_i32_1 = arith.constant 0 : i32
    return %c0_i32, %c0_i32_0 : i32, i32
  }
  func.func @transform_2(%arg0: i32) -> (i32, i32) {
    %c0_i32 = arith.constant 0 : i32
    %c0_i32_0 = arith.constant 0 : i32
    %c0_i32_1 = arith.constant 0 : i32
    return %c0_i32, %c0_i32_0 : i32, i32
  }
  func.func @transform_3(%arg0: i32) -> (i32, i32) {
    %c0_i32 = arith.constant 0 : i32
    %c0_i32_0 = arith.constant 0 : i32
    %c0_i32_1 = arith.constant 0 : i32
    return %c0_i32, %c0_i32_0 : i32, i32
  }
  func.func @transform_4(%arg0: i32) -> (i32, i32) {
    %c0_i32 = arith.constant 0 : i32
    %c0_i32_0 = arith.constant 0 : i32
    %c0_i32_1 = arith.constant 0 : i32
    return %c0_i32, %c0_i32_0 : i32, i32
  }
  func.func @transform_5(%arg0: i32) -> (i32, i32) {
    %c0_i32 = arith.constant 0 : i32
    %c0_i32_0 = arith.constant 0 : i32
    return %arg0, %c0_i32 : i32, i32
  }
}

</mosaic_0001>

<llo_original>
// kernel: tpu_custom_call.1
$region0: #{tpu_custom_call.1}
  #allocation0 [shape = 'u32[]', space=smem, size = 0x4, offset = 0x4, fixed_abs, tag = 'smem constant byte address 0x4 - core index']
  #allocation1 [shape = 'u32[144,128]{1,0:T(1,128)}', space=vmem, size = 0x12000, scoped, tag = 'internal scratch']
  %s0 = inlined_call_operand.hbm [shape: f32[32,128], index: 0, kind: input, shape index: {}]
  %s1 = inlined_call_operand.hbm [shape: f32[128,512], index: 1, kind: input, shape index: {}]
  %s2 = inlined_call_operand.hbm [shape: f32[1,512], index: 2, kind: input, shape index: {}]
  %s3 = inlined_call_operand.hbm [shape: f32[512,128], index: 3, kind: input, shape index: {}]
  %s4 = inlined_call_operand.vmem [shape: f32[1,128], index: 4, kind: input, shape index: {}]
  %s5 = inlined_call_operand.hbm [shape: f32[32,128], index: 5, kind: output, shape index: {}]
  %s6 = sld [smem:[#allocation0]]
  $region46: #{tpu_custom_call.1} parent=0
    _
  %s8 = ssub.s32 1, %s6
  %s9 = scalar_select 0, %s8, %s6
  $region1: #{tpu_custom_call.1} parent=0
    #allocation2 [shape = 'u8[16384]{0}', space=vmem, size = 0x4000, scoped, tag = 'input window, operand 0, single buffered']
    #allocation3 [shape = 's32[1]{0}', space=sflag, size = 0x4, scoped, tag = 'scoped memory for tpu_custom_call.1']
    #allocation4 [shape = 's32[1]{0}', space=sflag, size = 0x4, scoped, tag = 'scoped memory for tpu_custom_call.1']
    #allocation5 [shape = 'u8[262144]{0}', space=vmem, size = 0x40000, scoped, tag = 'input window, operand 1, single buffered']
    #allocation6 [shape = 's32[1]{0}', space=sflag, size = 0x4, scoped, tag = 'scoped memory for tpu_custom_call.1']
    #allocation7 [shape = 'u8[2048]{0}', space=vmem, size = 0x800, scoped, tag = 'input window, operand 2, single buffered']
    #allocation8 [shape = 'u8[262144]{0}', space=vmem, size = 0x40000, scoped, tag = 'input window, operand 3, single buffered']
    #allocation9 [shape = 's32[1]{0}', space=sflag, size = 0x4, scoped, tag = 'scoped memory for tpu_custom_call.1']
    #allocation10 [shape = 'u8[16384]{0}', space=vmem, size = 0x4000, scoped, tag = 'output window, operand 0, single buffered']
    %10 = vsyncpa [#allocation3], 0
    %11 = vsyncpa [#allocation6], 0
    %12 = vsyncpa [#allocation9], 0
    %13 = vsyncpa [#allocation4], 0
    // Predicated region
    $region2: #{tpu_custom_call.1} parent=1 // pred_check
      _
    $region3: #{tpu_custom_call.1} parent=1 // pred_check_branch
      %15 = sbr.rel (0) target = $region5
    $region4: #{tpu_custom_call.1} parent=1 // pred_region
      %s17 = ssub.s32 512, 512
      %18 = vsyncadd [#allocation3], %s17
      %s19 = sshll.u32 [#allocation2], 4
      %s20 = int_to_ptr.vmem [resolvable:$true] %s19
      %25 = dma.hbm_to_vmem [thread:$0]  %s0, 512, %s20, [#allocation3], 128, 128, 8
    $region5: #{tpu_custom_call.1} parent=1 // pred_fallthru
      _
    // Predicated region
    $region6: #{tpu_custom_call.1} parent=1 // pred_check
      _
    $region7: #{tpu_custom_call.1} parent=1 // pred_check_branch
      %27 = sbr.rel (0) target = $region9
    $region8: #{tpu_custom_call.1} parent=1 // pred_region
      %s29 = ssub.s32 8192, 8192
      %30 = vsyncadd [#allocation6], %s29
      %s31 = sshll.u32 [#allocation5], 4
      %s32 = int_to_ptr.vmem [resolvable:$true] %s31
      %37 = dma.hbm_to_vmem [thread:$0]  %s1, 8192, %s32, [#allocation6], 512, 512, 32
    $region9: #{tpu_custom_call.1} parent=1 // pred_fallthru
      _
    // Predicated region
    $region10: #{tpu_custom_call.1} parent=1 // pred_check
      _
    $region11: #{tpu_custom_call.1} parent=1 // pred_check_branch
      %39 = sbr.rel (0) target = $region13
    $region12: #{tpu_custom_call.1} parent=1 // pred_region
      %s41 = ssub.s32 64, 64
      %42 = vsyncadd [#allocation6], %s41
      %s44 = sshll.u32 [#allocation7], 4
      %s45 = int_to_ptr.vmem [resolvable:$true] %s44
      %47 = dma.hbm_to_vmem [thread:$0]  %s2, 64, %s45, [#allocation6]
    $region13: #{tpu_custom_call.1} parent=1 // pred_fallthru
      _
    // Predicated region
    $region14: #{tpu_custom_call.1} parent=1 // pred_check
      _
    $region15: #{tpu_custom_call.1} parent=1 // pred_check_branch
      %49 = sbr.rel (0) target = $region17
    $region16: #{tpu_custom_call.1} parent=1 // pred_region
      %s51 = ssub.s32 8192, 8192
      %52 = vsyncadd [#allocation9], %s51
      %s53 = sshll.u32 [#allocation8], 4
      %s54 = int_to_ptr.vmem [resolvable:$true] %s53
      %59 = dma.hbm_to_vmem [thread:$0]  %s3, 8192, %s54, [#allocation9], 128, 128, 8
    $region17: #{tpu_custom_call.1} parent=1 // pred_fallthru
      _
    // Predicated region
    $region18: #{tpu_custom_call.1} parent=1 // pred_check
      _
    $region19: #{tpu_custom_call.1} parent=1 // pred_check_branch
      %61 = sbr.rel (0) target = $region21
    $region20: #{tpu_custom_call.1} parent=1 // pred_region
      _
    $region21: #{tpu_custom_call.1} parent=1 // pred_fallthru
      _
    // Predicated region
    $region22: #{tpu_custom_call.1} parent=1 // pred_check
      _
    $region23: #{tpu_custom_call.1} parent=1 // pred_check_branch
      %63 = sbr.rel (0) target = $region25
    $region24: #{tpu_custom_call.1} parent=1 // pred_region
      %64 = dma.done [#allocation3], 512
    $region25: #{tpu_custom_call.1} parent=1 // pred_fallthru
      _
    // Predicated region
    $region26: #{tpu_custom_call.1} parent=1 // pred_check
      _
    $region27: #{tpu_custom_call.1} parent=1 // pred_check_branch
      %66 = sbr.rel (0) target = $region29
    $region28: #{tpu_custom_call.1} parent=1 // pred_region
      %67 = dma.done [#allocation6], 8192
    $region29: #{tpu_custom_call.1} parent=1 // pred_fallthru
      _
    // Predicated region
    $region30: #{tpu_custom_call.1} parent=1 // pred_check
      _
    $region31: #{tpu_custom_call.1} parent=1 // pred_check_branch
      %69 = sbr.rel (0) target = $region33
    $region32: #{tpu_custom_call.1} parent=1 // pred_region
      %70 = dma.done [#allocation6], 64
    $region33: #{tpu_custom_call.1} parent=1 // pred_fallthru
      _
    // Predicated region
    $region34: #{tpu_custom_call.1} parent=1 // pred_check
      _
    $region35: #{tpu_custom_call.1} parent=1 // pred_check_branch
      %72 = sbr.rel (0) target = $region37
    $region36: #{tpu_custom_call.1} parent=1 // pred_region
      %73 = dma.done [#allocation9], 8192
    $region37: #{tpu_custom_call.1} parent=1 // pred_fallthru
      _
    %v74 = vld [vmem:[#allocation2] sm:$0xff]
    %v75 = vld [vmem:[#allocation2 + $0x8] sm:$0xff]
    %v76 = vld [vmem:[#allocation2 + $0x10] sm:$0xff]
    %v77 = vld [vmem:[#allocation2 + $0x18] sm:$0xff]
    %v78 = vld [vmem:[#allocation5] sm:$0xff]
    %v79 = vld [vmem:[#allocation5 + $0x8] sm:$0xff]
    %v80 = vld [vmem:[#allocation5 + $0x10] sm:$0xff]
    %v81 = vld [vmem:[#allocation5 + $0x18] sm:$0xff]
    %v82 = vld [vmem:[#allocation5 + $0x20] sm:$0xff]
    %v83 = vld [vmem:[#allocation5 + $0x28] sm:$0xff]
    %v84 = vld [vmem:[#allocation5 + $0x30] sm:$0xff]
    %v85 = vld [vmem:[#allocation5 + $0x38] sm:$0xff]
    %v86 = vld [vmem:[#allocation5 + $0x40] sm:$0xff]
    %v87 = vld [vmem:[#allocation5 + $0x48] sm:$0xff]
    %v88 = vld [vmem:[#allocation5 + $0x50] sm:$0xff]
    %v89 = vld [vmem:[#allocation5 + $0x58] sm:$0xff]
    %v90 = vld [vmem:[#allocation5 + $0x60] sm:$0xff]
    %v91 = vld [vmem:[#allocation5 + $0x68] sm:$0xff]
    %v92 = vld [vmem:[#allocation5 + $0x70] sm:$0xff]
    %v93 = vld [vmem:[#allocation5 + $0x78] sm:$0xff]
    %v94 = vld [vmem:[#allocation5 + $0x80] sm:$0xff]
    %v95 = vld [vmem:[#allocation5 + $0x88] sm:$0xff]
    %v96 = vld [vmem:[#allocation5 + $0x90] sm:$0xff]
    %v97 = vld [vmem:[#allocation5 + $0x98] sm:$0xff]
    %v98 = vld [vmem:[#allocation5 + $0xa0] sm:$0xff]
    %v99 = vld [vmem:[#allocation5 + $0xa8] sm:$0xff]
    %v100 = vld [vmem:[#allocation5 + $0xb0] sm:$0xff]
    %v101 = vld [vmem:[#allocation5 + $0xb8] sm:$0xff]
    %v102 = vld [vmem:[#allocation5 + $0xc0] sm:$0xff]
    %v103 = vld [vmem:[#allocation5 + $0xc8] sm:$0xff]
    %v104 = vld [vmem:[#allocation5 + $0xd0] sm:$0xff]
    %v105 = vld [vmem:[#allocation5 + $0xd8] sm:$0xff]
    %v106 = vld [vmem:[#allocation5 + $0xe0] sm:$0xff]
    %v107 = vld [vmem:[#allocation5 + $0xe8] sm:$0xff]
    %v108 = vld [vmem:[#allocation5 + $0xf0] sm:$0xff]
    %v109 = vld [vmem:[#allocation5 + $0xf8] sm:$0xff]
    %v110 = vld [vmem:[#allocation5 + $0x100] sm:$0xff]
    %v111 = vld [vmem:[#allocation5 + $0x108] sm:$0xff]
    %v112 = vld [vmem:[#allocation5 + $0x110] sm:$0xff]
    %v113 = vld [vmem:[#allocation5 + $0x118] sm:$0xff]
    %v114 = vld [vmem:[#allocation5 + $0x120] sm:$0xff]
    %v115 = vld [vmem:[#allocation5 + $0x128] sm:$0xff]
    %v116 = vld [vmem:[#allocation5 + $0x130] sm:$0xff]
    %v117 = vld [vmem:[#allocation5 + $0x138] sm:$0xff]
    %v118 = vld [vmem:[#allocation5 + $0x140] sm:$0xff]
    %v119 = vld [vmem:[#allocation5 + $0x148] sm:$0xff]
    %v120 = vld [vmem:[#allocation5 + $0x150] sm:$0xff]
    %v121 = vld [vmem:[#allocation5 + $0x158] sm:$0xff]
    %v122 = vld [vmem:[#allocation5 + $0x160] sm:$0xff]
    %v123 = vld [vmem:[#allocation5 + $0x168] sm:$0xff]
    %v124 = vld [vmem:[#allocation5 + $0x170] sm:$0xff]
    %v125 = vld [vmem:[#allocation5 + $0x178] sm:$0xff]
    %v126 = vld [vmem:[#allocation5 + $0x180] sm:$0xff]
    %v127 = vld [vmem:[#allocation5 + $0x188] sm:$0xff]
    %v128 = vld [vmem:[#allocation5 + $0x190] sm:$0xff]
    %v129 = vld [vmem:[#allocation5 + $0x198] sm:$0xff]
    %v130 = vld [vmem:[#allocation5 + $0x1a0] sm:$0xff]
    %v131 = vld [vmem:[#allocation5 + $0x1a8] sm:$0xff]
    %v132 = vld [vmem:[#allocation5 + $0x1b0] sm:$0xff]
    %v133 = vld [vmem:[#allocation5 + $0x1b8] sm:$0xff]
    %v134 = vld [vmem:[#allocation5 + $0x1c0] sm:$0xff]
    %v135 = vld [vmem:[#allocation5 + $0x1c8] sm:$0xff]
    %v136 = vld [vmem:[#allocation5 + $0x1d0] sm:$0xff]
    %v137 = vld [vmem:[#allocation5 + $0x1d8] sm:$0xff]
    %v138 = vld [vmem:[#allocation5 + $0x1e0] sm:$0xff]
    %v139 = vld [vmem:[#allocation5 + $0x1e8] sm:$0xff]
    %v140 = vld [vmem:[#allocation5 + $0x1f0] sm:$0xff]
    %v141 = vld [vmem:[#allocation5 + $0x1f8] sm:$0xff]
    %v142 = vld [vmem:[#allocation7] sm:$0xf]
    %v144 = vlaneseq
    %v145 = vshrl.u32 %v144, 7
    %v146 = vsub.s32 0, %v145
    %v147 = vrot.slane %v142, %v146
    %v148 = vlaneseq
    %v149 = vshrl.u32 %v148, 7
    %v150 = vsub.s32 1, %v149
    %v151 = vrot.slane %v142, %v150
    %v152 = vlaneseq
    %v153 = vshrl.u32 %v152, 7
    %v154 = vsub.s32 2, %v153
    %v155 = vrot.slane %v142, %v154
    %v156 = vlaneseq
    %v157 = vshrl.u32 %v156, 7
    %v158 = vsub.s32 3, %v157
    %v159 = vrot.slane %v142, %v158
    %164 = vmatprep.subr.mxu0 %v139
    %165 = vmatpush1.msra.mxu0 %v138
    %166 = vmatprep.subr.mxu0 %v135
    %167 = vmatpush1.msra.mxu0 %v134
    %168 = vmatprep.subr.mxu0 %v131
    %169 = vmatpush1.msra.mxu0 %v130
    %170 = vmatprep.subr.mxu0 %v127
    %171 = vmatpush1.msra.mxu0 %v126
    %172 = vmatprep.subr.mxu0 %v123
    %173 = vmatpush1.msra.mxu0 %v122
    %174 = vmatprep.subr.mxu0 %v119
    %175 = vmatpush1.msra.mxu0 %v118
    %176 = vmatprep.subr.mxu0 %v115
    %177 = vmatpush1.msra.mxu0 %v114
    %178 = vmatprep.subr.mxu0 %v111
    %179 = vmatpush1.msra.mxu0 %v110
    %180 = vmatprep.subr.mxu0 %v107
    %181 = vmatpush1.msra.mxu0 %v106
    %182 = vmatprep.subr.mxu0 %v103
    %183 = vmatpush1.msra.mxu0 %v102
    %184 = vmatprep.subr.mxu0 %v99
    %185 = vmatpush1.msra.mxu0 %v98
    %186 = vmatprep.subr.mxu0 %v95
    %187 = vmatpush1.msra.mxu0 %v94
    %188 = vmatprep.subr.mxu0 %v91
    %189 = vmatpush1.msra.mxu0 %v90
    %190 = vmatprep.subr.mxu0 %v87
    %191 = vmatpush1.msra.mxu0 %v86
    %192 = vmatprep.subr.mxu0 %v83
    %193 = vmatpush1.msra.mxu0 %v82
    %194 = vmatprep.subr.mxu0 %v79
    %195 = vmatpush1.msra.mxu0 %v78
    %196 = vmatprep.subr.mxu0 0.0
    %197 = vmatpush2.msra.mxu0 0.0
    %198 = vmatprep.subr.mxu0 0.0
    %199 = vmatpush2.msra.mxu0 0.0
    %200 = vmatprep.subr.mxu0 0.0
    %201 = vmatpush2.msra.mxu0 0.0
    %202 = vmatprep.subr.mxu0 0.0
    %203 = vmatpush2.msra.mxu0 0.0
    %204 = vmatprep.subr.mxu0 0.0
    %205 = vmatpush2.msra.mxu0 0.0
    %206 = vmatprep.subr.mxu0 0.0
    %207 = vmatpush2.msra.mxu0 0.0
    %208 = vmatprep.subr.mxu0 0.0
    %209 = vmatpush2.msra.mxu0 0.0
    %210 = vmatprep.subr.mxu0 0.0
    %211 = vmatpush2.msra.mxu0 0.0
    %212 = vmatprep.subr.mxu0 0.0
    %213 = vmatpush2.msra.mxu0 0.0
    %214 = vmatprep.subr.mxu0 0.0
    %215 = vmatpush2.msra.mxu0 0.0
    %216 = vmatprep.subr.mxu0 0.0
    %217 = vmatpush2.msra.mxu0 0.0
    %218 = vmatprep.subr.mxu0 0.0
    %219 = vmatpush2.msra.mxu0 0.0
    %220 = vmatprep.subr.mxu0 0.0
    %221 = vmatpush2.msra.mxu0 0.0
    %222 = vmatprep.subr.mxu0 0.0
    %223 = vmatpush2.msra.mxu0 0.0
    %224 = vmatprep.subr.mxu0 0.0
    %225 = vmatpush2.msra.mxu0 0.0
    %226 = vmatprep.subr.mxu0 0.0
    %227 = vmatpush2.msra.mxu0 0.0
    %228 = vmatprep.mubr.f32.mxu0 0.0
    %229 = vmatmul.mubr.f32.gmra.mxu0 %v74
    %v230 = vpop.f32.mrf.mxu0
    %v231 = vadd.f32 %v147, %v230
    %v232 = vpop.f32.mrf.mxu0
    %v233 = vadd.f32 %v151, %v232
    %234 = vmatprep.mubr.f32.mxu0 0.0
    %235 = vmatmul.mubr.f32.gmra.mxu0 %v75
    %v236 = vpop.f32.mrf.mxu0
    %v237 = vadd.f32 %v147, %v236
    %v238 = vpop.f32.mrf.mxu0
    %v239 = vadd.f32 %v151, %v238
    %240 = vmatprep.mubr.f32.mxu0 0.0
    %241 = vmatmul.mubr.f32.gmra.mxu0 %v76
    %v242 = vpop.f32.mrf.mxu0
    %v243 = vadd.f32 %v147, %v242
    %v244 = vpop.f32.mrf.mxu0
    %v245 = vadd.f32 %v151, %v244
    %246 = vmatprep.mubr.f32.mxu0 0.0
    %247 = vmatmul.mubr.f32.gmra.mxu0 %v77
    %v248 = vpop.f32.mrf.mxu0
    %v249 = vadd.f32 %v147, %v248
    %v250 = vpop.f32.mrf.mxu0
    %v251 = vadd.f32 %v151, %v250
    %252 = vdwg.mxu0
    %253 = vmatprep.subr.mxu0 %v141
    %254 = vmatpush1.msra.mxu0 %v140
    %255 = vmatprep.subr.mxu0 %v137
    %256 = vmatpush1.msra.mxu0 %v136
    %257 = vmatprep.subr.mxu0 %v133
    %258 = vmatpush1.msra.mxu0 %v132
    %259 = vmatprep.subr.mxu0 %v129
    %260 = vmatpush1.msra.mxu0 %v128
    %261 = vmatprep.subr.mxu0 %v125
    %262 = vmatpush1.msra.mxu0 %v124
    %263 = vmatprep.subr.mxu0 %v121
    %264 = vmatpush1.msra.mxu0 %v120
    %265 = vmatprep.subr.mxu0 %v117
    %266 = vmatpush1.msra.mxu0 %v116
    %267 = vmatprep.subr.mxu0 %v113
    %268 = vmatpush1.msra.mxu0 %v112
    %269 = vmatprep.subr.mxu0 %v109
    %270 = vmatpush1.msra.mxu0 %v108
    %271 = vmatprep.subr.mxu0 %v105
    %272 = vmatpush1.msra.mxu0 %v104
    %273 = vmatprep.subr.mxu0 %v101
    %274 = vmatpush1.msra.mxu0 %v100
    %275 = vmatprep.subr.mxu0 %v97
    %276 = vmatpush1.msra.mxu0 %v96
    %277 = vmatprep.subr.mxu0 %v93
    %278 = vmatpush1.msra.mxu0 %v92
    %279 = vmatprep.subr.mxu0 %v89
    %280 = vmatpush1.msra.mxu0 %v88
    %281 = vmatprep.subr.mxu0 %v85
    %282 = vmatpush1.msra.mxu0 %v84
    %283 = vmatprep.subr.mxu0 %v81
    %284 = vmatpush1.msra.mxu0 %v80
    %285 = vmatprep.subr.mxu0 0.0
    %286 = vmatpush2.msra.mxu0 0.0
    %287 = vmatprep.subr.mxu0 0.0
    %288 = vmatpush2.msra.mxu0 0.0
    %289 = vmatprep.subr.mxu0 0.0
    %290 = vmatpush2.msra.mxu0 0.0
    %291 = vmatprep.subr.mxu0 0.0
    %292 = vmatpush2.msra.mxu0 0.0
    %293 = vmatprep.subr.mxu0 0.0
    %294 = vmatpush2.msra.mxu0 0.0
    %295 = vmatprep.subr.mxu0 0.0
    %296 = vmatpush2.msra.mxu0 0.0
    %297 = vmatprep.subr.mxu0 0.0
    %298 = vmatpush2.msra.mxu0 0.0
    %299 = vmatprep.subr.mxu0 0.0
    %300 = vmatpush2.msra.mxu0 0.0
    %301 = vmatprep.subr.mxu0 0.0
    %302 = vmatpush2.msra.mxu0 0.0
    %303 = vmatprep.subr.mxu0 0.0
    %304 = vmatpush2.msra.mxu0 0.0
    %305 = vmatprep.subr.mxu0 0.0
    %306 = vmatpush2.msra.mxu0 0.0
    %307 = vmatprep.subr.mxu0 0.0
    %308 = vmatpush2.msra.mxu0 0.0
    %309 = vmatprep.subr.mxu0 0.0
    %310 = vmatpush2.msra.mxu0 0.0
    %311 = vmatprep.subr.mxu0 0.0
    %312 = vmatpush2.msra.mxu0 0.0
    %313 = vmatprep.subr.mxu0 0.0
    %314 = vmatpush2.msra.mxu0 0.0
    %315 = vmatprep.subr.mxu0 0.0
    %316 = vmatpush2.msra.mxu0 0.0
    %317 = vmatprep.mubr.f32.mxu0 0.0
    %318 = vmatmul.mubr.f32.gmra.mxu0 %v74
    %v319 = vpop.f32.mrf.mxu0
    %v320 = vadd.f32 %v155, %v319
    %v321 = vpop.f32.mrf.mxu0
    %v322 = vadd.f32 %v159, %v321
    %323 = vmatprep.mubr.f32.mxu0 0.0
    %324 = vmatmul.mubr.f32.gmra.mxu0 %v75
    %v325 = vpop.f32.mrf.mxu0
    %v326 = vadd.f32 %v155, %v325
    %v327 = vpop.f32.mrf.mxu0
    %v328 = vadd.f32 %v159, %v327
    %329 = vmatprep.mubr.f32.mxu0 0.0
    %330 = vmatmul.mubr.f32.gmra.mxu0 %v76
    %v331 = vpop.f32.mrf.mxu0
    %v332 = vadd.f32 %v155, %v331
    %v333 = vpop.f32.mrf.mxu0
    %v334 = vadd.f32 %v159, %v333
    %335 = vmatprep.mubr.f32.mxu0 0.0
    %336 = vmatmul.mubr.f32.gmra.mxu0 %v77
    %v337 = vpop.f32.mrf.mxu0
    %v338 = vadd.f32 %v155, %v337
    %v339 = vpop.f32.mrf.mxu0
    %v340 = vadd.f32 %v159, %v339
    %341 = vdwg.mxu0
    %v342 = vmul.f32 %v231, 0.5
    %v343 = vmul.f32 %v233, 0.5
    %v344 = vmul.f32 %v320, 0.5
    %v345 = vmul.f32 %v322, 0.5
    %v346 = vmul.f32 %v237, 0.5
    %v347 = vmul.f32 %v239, 0.5
    %v348 = vmul.f32 %v326, 0.5
    %v349 = vmul.f32 %v328, 0.5
    %v350 = vmul.f32 %v243, 0.5
    %v351 = vmul.f32 %v245, 0.5
    %v352 = vmul.f32 %v332, 0.5
    %v353 = vmul.f32 %v334, 0.5
    %v354 = vmul.f32 %v249, 0.5
    %v355 = vmul.f32 %v251, 0.5
    %v356 = vmul.f32 %v338, 0.5
    %v357 = vmul.f32 %v340, 0.5
    %v358 = vmul.f32 %v231, 0.044715
    %v359 = vmul.f32 %v233, 0.044715
    %v360 = vmul.f32 %v320, 0.044715
    %v361 = vmul.f32 %v322, 0.044715
    %v362 = vmul.f32 %v237, 0.044715
    %v363 = vmul.f32 %v239, 0.044715
    %v364 = vmul.f32 %v326, 0.044715
    %v365 = vmul.f32 %v328, 0.044715
    %v366 = vmul.f32 %v243, 0.044715
    %v367 = vmul.f32 %v245, 0.044715
    %v368 = vmul.f32 %v332, 0.044715
    %v369 = vmul.f32 %v334, 0.044715
    %v370 = vmul.f32 %v249, 0.044715
    %v371 = vmul.f32 %v251, 0.044715
    %v372 = vmul.f32 %v338, 0.044715
    %v373 = vmul.f32 %v340, 0.044715
    %v374 = vmul.f32 %v358, %v231
    %v375 = vmul.f32 %v359, %v233
    %v376 = vmul.f32 %v360, %v320
    %v377 = vmul.f32 %v361, %v322
    %v378 = vmul.f32 %v362, %v237
    %v379 = vmul.f32 %v363, %v239
    %v380 = vmul.f32 %v364, %v326
    %v381 = vmul.f32 %v365, %v328
    %v382 = vmul.f32 %v366, %v243
    %v383 = vmul.f32 %v367, %v245
    %v384 = vmul.f32 %v368, %v332
    %v385 = vmul.f32 %v369, %v334
    %v386 = vmul.f32 %v370, %v249
    %v387 = vmul.f32 %v371, %v251
    %v388 = vmul.f32 %v372, %v338
    %v389 = vmul.f32 %v373, %v340
    %v390 = vmul.f32 %v374, %v231
    %v391 = vmul.f32 %v375, %v233
    %v392 = vmul.f32 %v376, %v320
    %v393 = vmul.f32 %v377, %v322
    %v394 = vmul.f32 %v378, %v237
    %v395 = vmul.f32 %v379, %v239
    %v396 = vmul.f32 %v380, %v326
    %v397 = vmul.f32 %v381, %v328
    %v398 = vmul.f32 %v382, %v243
    %v399 = vmul.f32 %v383, %v245
    %v400 = vmul.f32 %v384, %v332
    %v401 = vmul.f32 %v385, %v334
    %v402 = vmul.f32 %v386, %v249
    %v403 = vmul.f32 %v387, %v251
    %v404 = vmul.f32 %v388, %v338
    %v405 = vmul.f32 %v389, %v340
    %v406 = vadd.f32 %v231, %v390
    %v407 = vadd.f32 %v233, %v391
    %v408 = vadd.f32 %v320, %v392
    %v409 = vadd.f32 %v322, %v393
    %v410 = vadd.f32 %v237, %v394
    %v411 = vadd.f32 %v239, %v395
    %v412 = vadd.f32 %v326, %v396
    %v413 = vadd.f32 %v328, %v397
    %v414 = vadd.f32 %v243, %v398
    %v415 = vadd.f32 %v245, %v399
    %v416 = vadd.f32 %v332, %v400
    %v417 = vadd.f32 %v334, %v401
    %v418 = vadd.f32 %v249, %v402
    %v419 = vadd.f32 %v251, %v403
    %v420 = vadd.f32 %v338, %v404
    %v421 = vadd.f32 %v340, %v405
    %v422 = vmul.f32 %v406, 0.7978846
    %v423 = vmul.f32 %v407, 0.7978846
    %v424 = vmul.f32 %v408, 0.7978846
    %v425 = vmul.f32 %v409, 0.7978846
    %v426 = vmul.f32 %v410, 0.7978846
    %v427 = vmul.f32 %v411, 0.7978846
    %v428 = vmul.f32 %v412, 0.7978846
    %v429 = vmul.f32 %v413, 0.7978846
    %v430 = vmul.f32 %v414, 0.7978846
    %v431 = vmul.f32 %v415, 0.7978846
    %v432 = vmul.f32 %v416, 0.7978846
    %v433 = vmul.f32 %v417, 0.7978846
    %v434 = vmul.f32 %v418, 0.7978846
    %v435 = vmul.f32 %v419, 0.7978846
    %v436 = vmul.f32 %v420, 0.7978846
    %v437 = vmul.f32 %v421, 0.7978846
    %v438 = vtanh.pop %v422
    %v439 = vtanh.pop %v423
    %v440 = vtanh.pop %v424
    %v441 = vtanh.pop %v425
    %v442 = vtanh.pop %v426
    %v443 = vtanh.pop %v427
    %v444 = vtanh.pop %v428
    %v445 = vtanh.pop %v429
    %v446 = vtanh.pop %v430
    %v447 = vtanh.pop %v431
    %v448 = vtanh.pop %v432
    %v449 = vtanh.pop %v433
    %v450 = vtanh.pop %v434
    %v451 = vtanh.pop %v435
    %v452 = vtanh.pop %v436
    %v453 = vtanh.pop %v437
    %v454 = vadd.f32 %v438, 1.0
    %v455 = vadd.f32 %v439, 1.0
    %v456 = vadd.f32 %v440, 1.0
    %v457 = vadd.f32 %v441, 1.0
    %v458 = vadd.f32 %v442, 1.0
    %v459 = vadd.f32 %v443, 1.0
    %v460 = vadd.f32 %v444, 1.0
    %v461 = vadd.f32 %v445, 1.0
    %v462 = vadd.f32 %v446, 1.0
    %v463 = vadd.f32 %v447, 1.0
    %v464 = vadd.f32 %v448, 1.0
    %v465 = vadd.f32 %v449, 1.0
    %v466 = vadd.f32 %v450, 1.0
    %v467 = vadd.f32 %v451, 1.0
    %v468 = vadd.f32 %v452, 1.0
    %v469 = vadd.f32 %v453, 1.0
    %v470 = vmul.f32 %v342, %v454
    %v471 = vmul.f32 %v343, %v455
    %v472 = vmul.f32 %v344, %v456
    %v473 = vmul.f32 %v345, %v457
    %v474 = vmul.f32 %v346, %v458
    %v475 = vmul.f32 %v347, %v459
    %v476 = vmul.f32 %v348, %v460
    %v477 = vmul.f32 %v349, %v461
    %v478 = vmul.f32 %v350, %v462
    %v479 = vmul.f32 %v351, %v463
    %v480 = vmul.f32 %v352, %v464
    %v481 = vmul.f32 %v353, %v465
    %v482 = vmul.f32 %v354, %v466
    %v483 = vmul.f32 %v355, %v467
    %v484 = vmul.f32 %v356, %v468
    %v485 = vmul.f32 %v357, %v469
    %v486 = vld [vmem:[#allocation8] sm:$0xff]
    %v487 = vld [vmem:[#allocation8 + $0x8] sm:$0xff]
    %v488 = vld [vmem:[#allocation8 + $0x10] sm:$0xff]
    %v489 = vld [vmem:[#allocation8 + $0x18] sm:$0xff]
    %v490 = vld [vmem:[#allocation8 + $0x20] sm:$0xff]
    %v491 = vld [vmem:[#allocation8 + $0x28] sm:$0xff]
    %v492 = vld [vmem:[#allocation8 + $0x30] sm:$0xff]
    %v493 = vld [vmem:[#allocation8 + $0x38] sm:$0xff]
    %v494 = vld [vmem:[#allocation8 + $0x40] sm:$0xff]
    %v495 = vld [vmem:[#allocation8 + $0x48] sm:$0xff]
    %v496 = vld [vmem:[#allocation8 + $0x50] sm:$0xff]
    %v497 = vld [vmem:[#allocation8 + $0x58] sm:$0xff]
    %v498 = vld [vmem:[#allocation8 + $0x60] sm:$0xff]
    %v499 = vld [vmem:[#allocation8 + $0x68] sm:$0xff]
    %v500 = vld [vmem:[#allocation8 + $0x70] sm:$0xff]
    %v501 = vld [vmem:[#allocation8 + $0x78] sm:$0xff]
    %v502 = vld [vmem:[#allocation8 + $0x80] sm:$0xff]
    %v503 = vld [vmem:[#allocation8 + $0x88] sm:$0xff]
    %v504 = vld [vmem:[#allocation8 + $0x90] sm:$0xff]
    %v505 = vld [vmem:[#allocation8 + $0x98] sm:$0xff]
    %v506 = vld [vmem:[#allocation8 + $0xa0] sm:$0xff]
    %v507 = vld [vmem:[#allocation8 + $0xa8] sm:$0xff]
    %v508 = vld [vmem:[#allocation8 + $0xb0] sm:$0xff]
    %v509 = vld [vmem:[#allocation8 + $0xb8] sm:$0xff]
    %v510 = vld [vmem:[#allocation8 + $0xc0] sm:$0xff]
    %v511 = vld [vmem:[#allocation8 + $0xc8] sm:$0xff]
    %v512 = vld [vmem:[#allocation8 + $0xd0] sm:$0xff]
    %v513 = vld [vmem:[#allocation8 + $0xd8] sm:$0xff]
    %v514 = vld [vmem:[#allocation8 + $0xe0] sm:$0xff]
    %v515 = vld [vmem:[#allocation8 + $0xe8] sm:$0xff]
    %v516 = vld [vmem:[#allocation8 + $0xf0] sm:$0xff]
    %v517 = vld [vmem:[#allocation8 + $0xf8] sm:$0xff]
    %v518 = vld [vmem:[#allocation8 + $0x100] sm:$0xff]
    %v519 = vld [vmem:[#allocation8 + $0x108] sm:$0xff]
    %v520 = vld [vmem:[#allocation8 + $0x110] sm:$0xff]
    %v521 = vld [vmem:[#allocation8 + $0x118] sm:$0xff]
    %v522 = vld [vmem:[#allocation8 + $0x120] sm:$0xff]
    %v523 = vld [vmem:[#allocation8 + $0x128] sm:$0xff]
    %v524 = vld [vmem:[#allocation8 + $0x130] sm:$0xff]
    %v525 = vld [vmem:[#allocation8 + $0x138] sm:$0xff]
    %v526 = vld [vmem:[#allocation8 + $0x140] sm:$0xff]
    %v527 = vld [vmem:[#allocation8 + $0x148] sm:$0xff]
    %v528 = vld [vmem:[#allocation8 + $0x150] sm:$0xff]
    %v529 = vld [vmem:[#allocation8 + $0x158] sm:$0xff]
    %v530 = vld [vmem:[#allocation8 + $0x160] sm:$0xff]
    %v531 = vld [vmem:[#allocation8 + $0x168] sm:$0xff]
    %v532 = vld [vmem:[#allocation8 + $0x170] sm:$0xff]
    %v533 = vld [vmem:[#allocation8 + $0x178] sm:$0xff]
    %v534 = vld [vmem:[#allocation8 + $0x180] sm:$0xff]
    %v535 = vld [vmem:[#allocation8 + $0x188] sm:$0xff]
    %v536 = vld [vmem:[#allocation8 + $0x190] sm:$0xff]
    %v537 = vld [vmem:[#allocation8 + $0x198] sm:$0xff]
    %v538 = vld [vmem:[#allocation8 + $0x1a0] sm:$0xff]
    %v539 = vld [vmem:[#allocation8 + $0x1a8] sm:$0xff]
    %v540 = vld [vmem:[#allocation8 + $0x1b0] sm:$0xff]
    %v541 = vld [vmem:[#allocation8 + $0x1b8] sm:$0xff]
    %v542 = vld [vmem:[#allocation8 + $0x1c0] sm:$0xff]
    %v543 = vld [vmem:[#allocation8 + $0x1c8] sm:$0xff]
    %v544 = vld [vmem:[#allocation8 + $0x1d0] sm:$0xff]
    %v545 = vld [vmem:[#allocation8 + $0x1d8] sm:$0xff]
    %v546 = vld [vmem:[#allocation8 + $0x1e0] sm:$0xff]
    %v547 = vld [vmem:[#allocation8 + $0x1e8] sm:$0xff]
    %v548 = vld [vmem:[#allocation8 + $0x1f0] sm:$0xff]
    %v549 = vld [vmem:[#allocation8 + $0x1f8] sm:$0xff]
    %v550 = vld [vmem:[%s4] sm:$0x1]
    %v552 = vlaneseq
    %v553 = vshrl.u32 %v552, 7
    %v554 = vsub.s32 0, %v553
    %v555 = vrot.slane %v550, %v554
    %557 = vmatprep.subr.mxu0 0.0
    %558 = vmatpush1.msra.mxu0 %v501
    %559 = vmatprep.subr.mxu0 0.0
    %560 = vmatpush1.msra.mxu0 %v500
    %561 = vmatprep.subr.mxu0 0.0
    %562 = vmatpush1.msra.mxu0 %v499
    %563 = vmatprep.subr.mxu0 0.0
    %564 = vmatpush1.msra.mxu0 %v498
    %565 = vmatprep.subr.mxu0 0.0
    %566 = vmatpush1.msra.mxu0 %v497
    %567 = vmatprep.subr.mxu0 0.0
    %568 = vmatpush1.msra.mxu0 %v496
    %569 = vmatprep.subr.mxu0 0.0
    %570 = vmatpush1.msra.mxu0 %v495
    %571 = vmatprep.subr.mxu0 0.0
    %572 = vmatpush1.msra.mxu0 %v494
    %573 = vmatprep.subr.mxu0 0.0
    %574 = vmatpush1.msra.mxu0 %v493
    %575 = vmatprep.subr.mxu0 0.0
    %576 = vmatpush1.msra.mxu0 %v492
    %577 = vmatprep.subr.mxu0 0.0
    %578 = vmatpush1.msra.mxu0 %v491
    %579 = vmatprep.subr.mxu0 0.0
    %580 = vmatpush1.msra.mxu0 %v490
    %581 = vmatprep.subr.mxu0 0.0
    %582 = vmatpush1.msra.mxu0 %v489
    %583 = vmatprep.subr.mxu0 0.0
    %584 = vmatpush1.msra.mxu0 %v488
    %585 = vmatprep.subr.mxu0 0.0
    %586 = vmatpush1.msra.mxu0 %v487
    %587 = vmatprep.subr.mxu0 0.0
    %588 = vmatpush1.msra.mxu0 %v486
    %589 = vmatprep.subr.mxu0 0.0
    %590 = vmatpush2.msra.mxu0 %v517
    %591 = vmatprep.subr.mxu0 0.0
    %592 = vmatpush2.msra.mxu0 %v516
    %593 = vmatprep.subr.mxu0 0.0
    %594 = vmatpush2.msra.mxu0 %v515
    %595 = vmatprep.subr.mxu0 0.0
    %596 = vmatpush2.msra.mxu0 %v514
    %597 = vmatprep.subr.mxu0 0.0
    %598 = vmatpush2.msra.mxu0 %v513
    %599 = vmatprep.subr.mxu0 0.0
    %600 = vmatpush2.msra.mxu0 %v512
    %601 = vmatprep.subr.mxu0 0.0
    %602 = vmatpush2.msra.mxu0 %v511
    %603 = vmatprep.subr.mxu0 0.0
    %604 = vmatpush2.msra.mxu0 %v510
    %605 = vmatprep.subr.mxu0 0.0
    %606 = vmatpush2.msra.mxu0 %v509
    %607 = vmatprep.subr.mxu0 0.0
    %608 = vmatpush2.msra.mxu0 %v508
    %609 = vmatprep.subr.mxu0 0.0
    %610 = vmatpush2.msra.mxu0 %v507
    %611 = vmatprep.subr.mxu0 0.0
    %612 = vmatpush2.msra.mxu0 %v506
    %613 = vmatprep.subr.mxu0 0.0
    %614 = vmatpush2.msra.mxu0 %v505
    %615 = vmatprep.subr.mxu0 0.0
    %616 = vmatpush2.msra.mxu0 %v504
    %617 = vmatprep.subr.mxu0 0.0
    %618 = vmatpush2.msra.mxu0 %v503
    %619 = vmatprep.subr.mxu0 0.0
    %620 = vmatpush2.msra.mxu0 %v502
    %621 = vmatprep.mubr.f32.mxu0 %v471
    %622 = vmatmul.mubr.f32.gmra.mxu0 %v470
    %v623 = vpop.f32.mrf.mxu0
    %v624 = vadd.f32 %v555, %v623
    %v625 = vpop.f32.mrf.mxu0
    %626 = vmatprep.mubr.f32.mxu0 %v475
    %627 = vmatmul.mubr.f32.gmra.mxu0 %v474
    %v628 = vpop.f32.mrf.mxu0
    %v629 = vadd.f32 %v555, %v628
    %v630 = vpop.f32.mrf.mxu0
    %631 = vmatprep.mubr.f32.mxu0 %v479
    %632 = vmatmul.mubr.f32.gmra.mxu0 %v478
    %v633 = vpop.f32.mrf.mxu0
    %v634 = vadd.f32 %v555, %v633
    %v635 = vpop.f32.mrf.mxu0
    %636 = vmatprep.mubr.f32.mxu0 %v483
    %637 = vmatmul.mubr.f32.gmra.mxu0 %v482
    %v638 = vpop.f32.mrf.mxu0
    %v639 = vadd.f32 %v555, %v638
    %v640 = vpop.f32.mrf.mxu0
    %641 = vdwg.mxu0
    %642 = vmatprep.subr.mxu0 0.0
    %643 = vmatpush1.msra.mxu0 %v533
    %644 = vmatprep.subr.mxu0 0.0
    %645 = vmatpush1.msra.mxu0 %v532
    %646 = vmatprep.subr.mxu0 0.0
    %647 = vmatpush1.msra.mxu0 %v531
    %648 = vmatprep.subr.mxu0 0.0
    %649 = vmatpush1.msra.mxu0 %v530
    %650 = vmatprep.subr.mxu0 0.0
    %651 = vmatpush1.msra.mxu0 %v529
    %652 = vmatprep.subr.mxu0 0.0
    %653 = vmatpush1.msra.mxu0 %v528
    %654 = vmatprep.subr.mxu0 0.0
    %655 = vmatpush1.msra.mxu0 %v527
    %656 = vmatprep.subr.mxu0 0.0
    %657 = vmatpush1.msra.mxu0 %v526
    %658 = vmatprep.subr.mxu0 0.0
    %659 = vmatpush1.msra.mxu0 %v525
    %660 = vmatprep.subr.mxu0 0.0
    %661 = vmatpush1.msra.mxu0 %v524
    %662 = vmatprep.subr.mxu0 0.0
    %663 = vmatpush1.msra.mxu0 %v523
    %664 = vmatprep.subr.mxu0 0.0
    %665 = vmatpush1.msra.mxu0 %v522
    %666 = vmatprep.subr.mxu0 0.0
    %667 = vmatpush1.msra.mxu0 %v521
    %668 = vmatprep.subr.mxu0 0.0
    %669 = vmatpush1.msra.mxu0 %v520
    %670 = vmatprep.subr.mxu0 0.0
    %671 = vmatpush1.msra.mxu0 %v519
    %672 = vmatprep.subr.mxu0 0.0
    %673 = vmatpush1.msra.mxu0 %v518
    %674 = vmatprep.subr.mxu0 0.0
    %675 = vmatpush2.msra.mxu0 %v549
    %676 = vmatprep.subr.mxu0 0.0
    %677 = vmatpush2.msra.mxu0 %v548
    %678 = vmatprep.subr.mxu0 0.0
    %679 = vmatpush2.msra.mxu0 %v547
    %680 = vmatprep.subr.mxu0 0.0
    %681 = vmatpush2.msra.mxu0 %v546
    %682 = vmatprep.subr.mxu0 0.0
    %683 = vmatpush2.msra.mxu0 %v545
    %684 = vmatprep.subr.mxu0 0.0
    %685 = vmatpush2.msra.mxu0 %v544
    %686 = vmatprep.subr.mxu0 0.0
    %687 = vmatpush2.msra.mxu0 %v543
    %688 = vmatprep.subr.mxu0 0.0
    %689 = vmatpush2.msra.mxu0 %v542
    %690 = vmatprep.subr.mxu0 0.0
    %691 = vmatpush2.msra.mxu0 %v541
    %692 = vmatprep.subr.mxu0 0.0
    %693 = vmatpush2.msra.mxu0 %v540
    %694 = vmatprep.subr.mxu0 0.0
    %695 = vmatpush2.msra.mxu0 %v539
    %696 = vmatprep.subr.mxu0 0.0
    %697 = vmatpush2.msra.mxu0 %v538
    %698 = vmatprep.subr.mxu0 0.0
    %699 = vmatpush2.msra.mxu0 %v537
    %700 = vmatprep.subr.mxu0 0.0
    %701 = vmatpush2.msra.mxu0 %v536
    %702 = vmatprep.subr.mxu0 0.0
    %703 = vmatpush2.msra.mxu0 %v535
    %704 = vmatprep.subr.mxu0 0.0
    %705 = vmatpush2.msra.mxu0 %v534
    %706 = vmatprep.mubr.f32.mxu0 %v473
    %707 = vmatmul.mubr.f32.gmra.mxu0 %v472
    %v708 = vpop.f32.mrf.mxu0
    %v709 = vadd.f32 %v624, %v708
    %v710 = vpop.f32.mrf.mxu0
    %711 = vmatprep.mubr.f32.mxu0 %v477
    %712 = vmatmul.mubr.f32.gmra.mxu0 %v476
    %v713 = vpop.f32.mrf.mxu0
    %v714 = vadd.f32 %v629, %v713
    %v715 = vpop.f32.mrf.mxu0
    %716 = vmatprep.mubr.f32.mxu0 %v481
    %717 = vmatmul.mubr.f32.gmra.mxu0 %v480
    %v718 = vpop.f32.mrf.mxu0
    %v719 = vadd.f32 %v634, %v718
    %v720 = vpop.f32.mrf.mxu0
    %721 = vmatprep.mubr.f32.mxu0 %v485
    %722 = vmatmul.mubr.f32.gmra.mxu0 %v484
    %v723 = vpop.f32.mrf.mxu0
    %v724 = vadd.f32 %v639, %v723
    %v725 = vpop.f32.mrf.mxu0
    %726 = vdwg.mxu0
    %727 = vst [vmem:[#allocation10] sm:$0xff] %v709
    %728 = vst [vmem:[#allocation10 + $0x8] sm:$0xff] %v714
    %729 = vst [vmem:[#allocation10 + $0x10] sm:$0xff] %v719
    %730 = vst [vmem:[#allocation10 + $0x18] sm:$0xff] %v724
    // Predicated region
    $region38: #{tpu_custom_call.1} parent=1 // pred_check
      _
    $region39: #{tpu_custom_call.1} parent=1 // pred_check_branch
      %732 = sbr.rel (0) target = $region41
    $region40: #{tpu_custom_call.1} parent=1 // pred_region
      %s734 = ssub.s32 512, 512
      %735 = vsyncadd [#allocation4], %s734
      %s736 = sshll.u32 [#allocation10], 4
      %s737 = int_to_ptr.vmem [resolvable:$true] %s736
      %742 = dma.vmem_to_hbm [thread:$0]  %s737, 512, %s5, [#allocation4], 128, 128, 8
    $region41: #{tpu_custom_call.1} parent=1 // pred_fallthru
      _
    // Predicated region
    $region42: #{tpu_custom_call.1} parent=1 // pred_check
      _
    $region43: #{tpu_custom_call.1} parent=1 // pred_check_branch
      %744 = sbr.rel (0) target = $region45
    $region44: #{tpu_custom_call.1} parent=1 // pred_region
      %745 = dma.done [#allocation4], 512
    $region45: #{tpu_custom_call.1} parent=1 // pred_fallthru
      _
    %746 = vsyncpa [#allocation3], 1
    %747 = vsyncpa [#allocation6], 1
    %748 = vsyncpa [#allocation9], 1
    %749 = vsyncpa [#allocation4], 1

</llo_original>
